<compile_context>
chip_gen: v7x
topology: tpu7x:2x2x1
jax: 0.10.0
libtpu: 0.0.40
codegen_flags: <defaults>
</compile_context>

<pallas_src>
import numpy as np
import jax
import jax.numpy as jnp
from jax.experimental import pallas as pl
from jax.experimental.pallas import tpu as pltpu


def _round_up(x, m):
    return (x + m - 1) // m * m


def _cdiv(a, b):
    return -(-a // b)


def _vmem_capacity_bytes():
    """Physical VMEM per TensorCore; conservative fallback if query fails."""
    try:
        return int(pltpu.get_tpu_info().vmem_capacity_bytes)
    except Exception:
        return 64 << 20  # v7x per-TC


def relate_classifier_kernel(bbox_ref, w12_ref, b12_ref, ct_ref, out_ref):
    """Fused forward for one batch tile.

    bbox_ref : (TB, 8)        raw flattened bboxes [x0,y0,x1,y1,x2,y2,x3,y3]
    w12_ref  : (8, 2*LP)      block-interleaved fc1/fc2 weights, 128-lane-padded halves
    b12_ref  : (1, 2*LP)      [b1 | 0 | 1] [b2 | 0 | 1]  (lane LP-1 of each half is 1.0)
    ct_ref   : (LP, R_pad)    (fc3(rel_embed) * w4).T zero-padded; row LP-1 carries b4
    out_ref  : (TB, R_pad)
    """
    LP = ct_ref.shape[0]
    # Single MXU matmul produces [sub | obj] (each padded to a 128-lane group).
    so = jnp.dot(bbox_ref[...], w12_ref[...],
                 preferred_element_type=jnp.float32) + b12_ref[...]        # (TB, 2*LP)
    # Split lands exactly on a vreg-group boundary (LP is a multiple of 128).
    s = so[:, :LP] * so[:, LP:]                                            # (TB, LP)
    # logits = (sub*obj) @ (c*w4).T + b4   (w4 and b4 already folded into ct).
    logits = jnp.dot(s, ct_ref[...], preferred_element_type=jnp.float32)  # (TB, R_pad)
    out_ref[...] = logits.astype(out_ref.dtype)


def precompute_constants(params):
    """Fold all input-independent work once (cache across forward calls)."""
    w1, b1 = params["w1"], params["b1"]
    w2, b2 = params["w2"], params["b2"]
    w3, b3 = params["w3"], params["b3"]
    w4, b4 = params["w4"], params["b4"]          # (1, L), (1, 1)
    rel = params["rel_embed"]

    L = w1.shape[1]
    R = rel.shape[0]
    LP = _round_up(L + 1, 128)                   # per-half lane width (+1 bias lane)
    r_pad = _round_up(R, 128)                    # lane-dense output

    # fc3 on the relation embeddings once; fold w4; pre-transpose; pad.
    c = rel @ w3 + b3                                            # (R, L)
    ct = (c * w4).T                                              # (L, R)
    ct_pad = jnp.zeros((LP, r_pad), jnp.float32)
    ct_pad = ct_pad.at[:L, :R].set(ct)
    ct_pad = ct_pad.at[LP - 1, :R].set(b4[0, 0])                 # fc4 bias row

    # Block-interleaved fc1/fc2 weight so that flat_bbox @ w12 = [sub | obj]:
    #   flat[:, 2k]   = bboxs[:, k, 0] -> fc1 row k (lanes 0..L-1)
    #   flat[:, 2k+1] = bboxs[:, k, 1] -> fc2 row k (lanes LP..LP+L-1)
    w12 = jnp.zeros((8, 2 * LP), jnp.float32)
    w12 = w12.at[0::2, :L].set(w1)
    w12 = w12.at[1::2, LP:LP + L].set(w2)

    b12 = jnp.zeros((1, 2 * LP), jnp.float32)
    b12 = b12.at[0, :L].set(b1[0])
    b12 = b12.at[0, LP:LP + L].set(b2[0])
    b12 = b12.at[0, LP - 1].set(1.0)             # constant-1 lane -> s[:, LP-1] == 1
    b12 = b12.at[0, 2 * LP - 1].set(1.0)

    return w12, b12, ct_pad


def _choose_tiling(B, r_pad, out_itemsize):
    """Batch tile size (multiple of 8) and padded batch.

    Goals: >=2 grid steps when B permits (v7x megacore sharding via
    dimension_semantics=('parallel',)), large tiles to amortize the ~0.35us
    per-grid-step overhead, a generation-aware VMEM cap, and padded waste
    bounded by (steps-1)*8 rows.
    """
    per_row_bytes = 2 * (8 * 4 + r_pad * out_itemsize)          # double-buffered in+out
    vmem = _vmem_capacity_bytes()
    tb_cap = (vmem // 8) // per_row_bytes                       # use <=1/8 of VMEM
    tb_cap = max(512, min(8192, tb_cap // 8 * 8))

    b8 = _round_up(max(B, 1), 8)
    n_groups = b8 // 8                                          # 8-row sublane groups
    cap_groups = max(tb_cap // 8, 1)
    n_steps = max(2, _cdiv(n_groups, cap_groups))               # >=2 steps when possible
    groups_per_tile = min(_cdiv(n_groups, n_steps), cap_groups)
    tb = max(groups_per_tile, 1) * 8
    b_pad = _round_up(b8, tb)
    return tb, b_pad


def relate_classifier_forward(bboxs, constants, num_relations,
                              out_dtype=jnp.float32):
    """bboxs: any shape reshapeable to (-1, 4, 2). Returns logits (B, R).

    out_dtype=jnp.bfloat16 halves output HBM traffic (the kernel is write-bound
    at large B); accumulation stays f32 in-kernel either way.
    """
    w12, b12, ct = constants
    LP2 = w12.shape[1]
    LP = LP2 // 2
    r_pad = ct.shape[1]

    flat = bboxs.reshape(-1, 8).astype(jnp.float32)              # (B, 8)
    B = flat.shape[0]

    tb, b_pad = _choose_tiling(B, r_pad, jnp.dtype(out_dtype).itemsize)
    if b_pad != B:
        flat = jnp.pad(flat, ((0, b_pad - B), (0, 0)))

    # Scoped-VMEM request: >= the 32 MiB v6e/v7x default (raises v5e's 16 MiB),
    # comfortably above what the double-buffered tiles + constants need.
    const_bytes = (w12.size + b12.size + ct.size) * 4
    tile_bytes = 2 * tb * (8 * 4 + r_pad * jnp.dtype(out_dtype).itemsize)
    vmem_limit = int(min(max(32 << 20, 2 * (const_bytes + tile_bytes)), 56 << 20))

    out = pl.pallas_call(
        relate_classifier_kernel,
        out_shape=jax.ShapeDtypeStruct((b_pad, r_pad), out_dtype),
        grid=(b_pad // tb,),
        in_specs=[
            pl.BlockSpec((tb, 8), lambda i: (i, 0)),        # bboxes, tiled over B
            pl.BlockSpec((8, LP2), lambda i: (0, 0)),       # fused fc1/fc2 weight
            pl.BlockSpec((1, LP2), lambda i: (0, 0)),       # fused fc1/fc2 bias (+1 lanes)
            pl.BlockSpec((LP, r_pad), lambda i: (0, 0)),    # (c*w4).T with b4 row, padded
        ],
        out_specs=pl.BlockSpec((tb, r_pad), lambda i: (i, 0)),
        compiler_params=pltpu.CompilerParams(
            dimension_semantics=("parallel",),
            vmem_limit_bytes=vmem_limit),
    )(flat, w12, b12, ct)

    # Consumers that can take the padded (b_pad, r_pad) block should skip this
    # slice (it is an extra output-sized HBM round trip).
    return out[:B, :num_relations]


def init_params(key, latent_dim, glove_dim, num_relations):
    """Deterministic synthetic params mimicking nn.Linear default init."""
    ks = jax.random.split(key, 9)

    def linear(kw, kb, fan_in, fan_out):
        bound = 1.0 / np.sqrt(fan_in)
        w = jax.random.uniform(kw, (fan_in, fan_out), jnp.float32, -bound, bound)
        b = jax.random.uniform(kb, (1, fan_out), jnp.float32, -bound, bound)
        return w, b

    w1, b1 = linear(ks[0], ks[1], 4, latent_dim)
    w2, b2 = linear(ks[2], ks[3], 4, latent_dim)
    w3, b3 = linear(ks[4], ks[5], glove_dim, latent_dim)
    w4, b4 = linear(ks[6], ks[7], latent_dim, 1)     # (L,1), (1,1)
    rel_embed = jax.random.normal(ks[8], (num_relations, glove_dim), jnp.float32)

    return dict(w1=w1, b1=b1, w2=w2, b2=b2, w3=w3, b3=b3,
                w4=w4.T,           # (1, L) for elementwise folding into c
                b4=b4,             # (1, 1)
                rel_embed=rel_embed)


def reference_forward(bboxs, params):
    """Pure-JAX reference matching the PyTorch forward literally."""
    bboxs = bboxs.reshape(-1, 4, 2).astype(jnp.float32)
    sub = bboxs[:, :, 0] @ params["w1"] + params["b1"]          # (B, L)
    obj = bboxs[:, :, 1] @ params["w2"] + params["b2"]          # (B, L)
    c = params["rel_embed"] @ params["w3"] + params["b3"]       # (R, L)
    xc = sub[:, None, :] * obj[:, None, :] * c[None, :, :]      # (B, R, L)
    logits = jnp.einsum("brl,l->br", xc, params["w4"][0]) + params["b4"][0, 0]
    return logits


if __name__ == "__main__":
    latent_dim = 32
    glove_dim = 32
    num_relations = 16
    batch = 8
    # NOTE: at this tiny B the call is launch/DMA-latency bound; the tiling and
    # MXU-shape work above only pays off once B is in the thousands.

    key = jax.random.PRNGKey(0)
    k_params, k_x = jax.random.split(key)
    params = init_params(k_params, latent_dim, glove_dim, num_relations)

    # All input-independent work (fc3, w4/b4 fold, weight packing) done ONCE.
    constants = precompute_constants(params)
    constants = jax.tree.map(jax.block_until_ready, constants)

    # bboxs: (batch, 8) -> viewed as (batch, 4, 2) inside forward
    bboxs = jax.random.uniform(k_x, (batch, 8), jnp.float32)

    out = relate_classifier_forward(bboxs, constants, num_relations)
    out = jax.block_until_ready(out)

    ref = reference_forward(bboxs, params)
    assert out.shape == (batch, num_relations)
    np.testing.assert_allclose(np.asarray(out), np.asarray(ref),
                               rtol=1e-5, atol=1e-5)
    print("KERNEL_OK")
</pallas_src>

<mosaic_0001>
module attributes {stable_mosaic.version = 11 : i64} {
  func.func @relate_classifier_kernel(%arg0: i32, %arg1: memref<8x8xf32, #tpu.memory_space<vmem>>, %arg2: memref<8x256xf32, #tpu.memory_space<vmem>>, %arg3: memref<1x256xf32, #tpu.memory_space<vmem>>, %arg4: memref<128x128xf32, #tpu.memory_space<vmem>>, %arg5: memref<8x128xf32, #tpu.memory_space<vmem>>) attributes {dimension_semantics = [#tpu.dimension_semantics<parallel>], iteration_bounds = array<i64: 1>, scalar_prefetch = 0 : i64, scratch_operands = 0 : i64, tpu.core_type = #tpu.core_type<tc>, window_params = [{transform_indices = @transform_0, window_bounds = array<i64: 8, 8>}, {pipeline_mode = #tpu.pipeline_mode<synchronous>, transform_indices = @transform_1, window_bounds = array<i64: 8, 256>}, {pipeline_mode = #tpu.pipeline_mode<synchronous>, transform_indices = @transform_2, window_bounds = array<i64: 1, 256>}, {pipeline_mode = #tpu.pipeline_mode<synchronous>, transform_indices = @transform_3, window_bounds = array<i64: 128, 128>}, {transform_indices = @transform_4, window_bounds = array<i64: 8, 128>}]} {
    %c0 = arith.constant 0 : index
    %c0_0 = arith.constant 0 : index
    %0 = vector.load %arg1[%c0, %c0_0] : memref<8x8xf32, #tpu.memory_space<vmem>>, vector<8x8xf32>
    %c0_1 = arith.constant 0 : index
    %c0_2 = arith.constant 0 : index
    %1 = vector.load %arg2[%c0_1, %c0_2] : memref<8x256xf32, #tpu.memory_space<vmem>>, vector<8x256xf32>
    %cst = arith.constant dense<0.000000e+00> : vector<8x256xf32>
    %2 = tpu.matmul %0, %1, %cst {dimension_numbers = #tpu.dot_dimension_numbers<[1], [0], [0], [1], [0, 0, 1, 1], [], []>} : vector<8x8xf32>, vector<8x256xf32>, vector<8x256xf32> -> vector<8x256xf32>
    %c0_3 = arith.constant 0 : index
    %c0_4 = arith.constant 0 : index
    %3 = vector.load %arg3[%c0_3, %c0_4] : memref<1x256xf32, #tpu.memory_space<vmem>>, vector<1x256xf32>
    %4 = vector.broadcast %3 : vector<1x256xf32> to vector<8x256xf32>
    %5 = arith.addf %2, %4 : vector<8x256xf32>
    %6 = vector.extract_strided_slice %5 {offsets = [0, 0], sizes = [8, 128], strides = [1, 1]} : vector<8x256xf32> to vector<8x128xf32>
    %7 = vector.extract_strided_slice %5 {offsets = [0, 128], sizes = [8, 128], strides = [1, 1]} : vector<8x256xf32> to vector<8x128xf32>
    %8 = arith.mulf %6, %7 : vector<8x128xf32>
    %c0_5 = arith.constant 0 : index
    %c0_6 = arith.constant 0 : index
    %9 = vector.load %arg4[%c0_5, %c0_6] : memref<128x128xf32, #tpu.memory_space<vmem>>, vector<128x128xf32>
    %cst_7 = arith.constant dense<0.000000e+00> : vector<8x128xf32>
    %10 = tpu.matmul %8, %9, %cst_7 {dimension_numbers = #tpu.dot_dimension_numbers<[1], [0], [0], [1], [0, 0, 1, 1], [], []>} : vector<8x128xf32>, vector<128x128xf32>, vector<8x128xf32> -> vector<8x128xf32>
    %c0_8 = arith.constant 0 : index
    %c0_9 = arith.constant 0 : index
    %11 = vector.load %arg5[%c0_8, %c0_9] : memref<8x128xf32, #tpu.memory_space<vmem>>, vector<8x128xf32>
    tpu.vector_store %arg5[%c0_8, %c0_9], %10 {strides = array<i32>} : memref<8x128xf32, #tpu.memory_space<vmem>>, vector<8x128xf32>,
    return
  }
  func.func @transform_0(%arg0: i32) -> (i32, i32) {
    %c0_i32 = arith.constant 0 : i32
    %c0_i32_0 = arith.constant 0 : i32
    return %arg0, %c0_i32 : i32, i32
  }
  func.func @transform_1(%arg0: i32) -> (i32, i32) {
    %c0_i32 = arith.constant 0 : i32
    %c0_i32_0 = arith.constant 0 : i32
    %c0_i32_1 = arith.constant 0 : i32
    return %c0_i32, %c0_i32_0 : i32, i32
  }
  func.func @transform_2(%arg0: i32) -> (i32, i32) {
    %c0_i32 = arith.constant 0 : i32
    %c0_i32_0 = arith.constant 0 : i32
    %c0_i32_1 = arith.constant 0 : i32
    return %c0_i32, %c0_i32_0 : i32, i32
  }
  func.func @transform_3(%arg0: i32) -> (i32, i32) {
    %c0_i32 = arith.constant 0 : i32
    %c0_i32_0 = arith.constant 0 : i32
    %c0_i32_1 = arith.constant 0 : i32
    return %c0_i32, %c0_i32_0 : i32, i32
  }
  func.func @transform_4(%arg0: i32) -> (i32, i32) {
    %c0_i32 = arith.constant 0 : i32
    %c0_i32_0 = arith.constant 0 : i32
    return %arg0, %c0_i32 : i32, i32
  }
}

</mosaic_0001>

<llo_original>
// kernel: tpu_custom_call.1
$region0: #{tpu_custom_call.1}
  #allocation0 [shape = 'u32[]', space=smem, size = 0x4, offset = 0x4, fixed_abs, tag = 'smem constant byte address 0x4 - core index']
  #allocation1 [shape = 'u32[144,128]{1,0:T(1,128)}', space=vmem, size = 0x12000, scoped, tag = 'internal scratch']
  %s0 = inlined_call_operand.hbm [shape: f32[8,8], index: 0, kind: input, shape index: {}]
  %s1 = inlined_call_operand.hbm [shape: f32[8,256], index: 1, kind: input, shape index: {}]
  %s2 = inlined_call_operand.vmem [shape: f32[1,256], index: 2, kind: input, shape index: {}]
  %s3 = inlined_call_operand.hbm [shape: f32[128,128], index: 3, kind: input, shape index: {}]
  %s4 = inlined_call_operand.hbm [shape: f32[8,128], index: 4, kind: output, shape index: {}]
  %s5 = sld [smem:[#allocation0]]
  $region38: #{tpu_custom_call.1} parent=0
    _
  %s7 = ssub.s32 1, %s5
  %s8 = scalar_select 0, %s7, %s5
  $region1: #{tpu_custom_call.1} parent=0
    #allocation2 [shape = 'u8[4096]{0}', space=vmem, size = 0x1000, scoped, tag = 'input window, operand 0, single buffered']
    #allocation3 [shape = 's32[1]{0}', space=sflag, size = 0x4, scoped, tag = 'scoped memory for tpu_custom_call.1']
    #allocation4 [shape = 's32[1]{0}', space=sflag, size = 0x4, scoped, tag = 'scoped memory for tpu_custom_call.1']
    #allocation5 [shape = 'u8[8192]{0}', space=vmem, size = 0x2000, scoped, tag = 'input window, operand 1, single buffered']
    #allocation6 [shape = 's32[1]{0}', space=sflag, size = 0x4, scoped, tag = 'scoped memory for tpu_custom_call.1']
    #allocation7 [shape = 'u8[65536]{0}', space=vmem, size = 0x10000, scoped, tag = 'input window, operand 3, single buffered']
    #allocation8 [shape = 'u8[4096]{0}', space=vmem, size = 0x1000, scoped, tag = 'output window, operand 0, single buffered']
    %9 = vsyncpa [#allocation3], 0
    %10 = vsyncpa [#allocation6], 0
    %11 = vsyncpa [#allocation4], 0
    // Predicated region
    $region2: #{tpu_custom_call.1} parent=1 // pred_check
      _
    $region3: #{tpu_custom_call.1} parent=1 // pred_check_branch
      %13 = sbr.rel (0) target = $region5
    $region4: #{tpu_custom_call.1} parent=1 // pred_region
      %s15 = ssub.s32 128, 128
      %16 = vsyncadd [#allocation3], %s15
      %s18 = sshll.u32 [#allocation2], 4
      %s19 = int_to_ptr.vmem [resolvable:$true] %s18
      %21 = dma.hbm_to_vmem [thread:$0]  %s0, 128, %s19, [#allocation3]
    $region5: #{tpu_custom_call.1} parent=1 // pred_fallthru
      _
    // Predicated region
    $region6: #{tpu_custom_call.1} parent=1 // pred_check
      _
    $region7: #{tpu_custom_call.1} parent=1 // pred_check_branch
      %23 = sbr.rel (0) target = $region9
    $region8: #{tpu_custom_call.1} parent=1 // pred_region
      %s25 = ssub.s32 256, 256
      %26 = vsyncadd [#allocation6], %s25
      %s28 = sshll.u32 [#allocation5], 4
      %s29 = int_to_ptr.vmem [resolvable:$true] %s28
      %31 = dma.hbm_to_vmem [thread:$0]  %s1, 256, %s29, [#allocation6]
    $region9: #{tpu_custom_call.1} parent=1 // pred_fallthru
      _
    // Predicated region
    $region10: #{tpu_custom_call.1} parent=1 // pred_check
      _
    $region11: #{tpu_custom_call.1} parent=1 // pred_check_branch
      %33 = sbr.rel (0) target = $region13
    $region12: #{tpu_custom_call.1} parent=1 // pred_region
      _
    $region13: #{tpu_custom_call.1} parent=1 // pred_fallthru
      _
    // Predicated region
    $region14: #{tpu_custom_call.1} parent=1 // pred_check
      _
    $region15: #{tpu_custom_call.1} parent=1 // pred_check_branch
      %35 = sbr.rel (0) target = $region17
    $region16: #{tpu_custom_call.1} parent=1 // pred_region
      %s37 = ssub.s32 2048, 2048
      %38 = vsyncadd [#allocation6], %s37
      %s39 = sshll.u32 [#allocation7], 4
      %s40 = int_to_ptr.vmem [resolvable:$true] %s39
      %45 = dma.hbm_to_vmem [thread:$0]  %s3, 2048, %s40, [#allocation6], 128, 128, 8
    $region17: #{tpu_custom_call.1} parent=1 // pred_fallthru
      _
    // Predicated region
    $region18: #{tpu_custom_call.1} parent=1 // pred_check
      _
    $region19: #{tpu_custom_call.1} parent=1 // pred_check_branch
      %47 = sbr.rel (0) target = $region21
    $region20: #{tpu_custom_call.1} parent=1 // pred_region
      %48 = dma.done [#allocation3], 128
    $region21: #{tpu_custom_call.1} parent=1 // pred_fallthru
      _
    // Predicated region
    $region22: #{tpu_custom_call.1} parent=1 // pred_check
      _
    $region23: #{tpu_custom_call.1} parent=1 // pred_check_branch
      %50 = sbr.rel (0) target = $region25
    $region24: #{tpu_custom_call.1} parent=1 // pred_region
      %51 = dma.done [#allocation6], 256
    $region25: #{tpu_custom_call.1} parent=1 // pred_fallthru
      _
    // Predicated region
    $region26: #{tpu_custom_call.1} parent=1 // pred_check
      _
    $region27: #{tpu_custom_call.1} parent=1 // pred_check_branch
      %53 = sbr.rel (0) target = $region29
    $region28: #{tpu_custom_call.1} parent=1 // pred_region
      %54 = dma.done [#allocation6], 2048
    $region29: #{tpu_custom_call.1} parent=1 // pred_fallthru
      _
    %v55 = vld [vmem:[#allocation2] sm:$0xff]
    %v56 = vld [vmem:[#allocation5] sm:$0xff]
    %v57 = vld [vmem:[#allocation5 + $0x8] sm:$0xff]
    %v58 = vld [vmem:[%s2] sm:$0x3]
    %v60 = vlaneseq
    %v61 = vshrl.u32 %v60, 7
    %v62 = vsub.s32 0, %v61
    %v63 = vrot.slane %v58, %v62
    %v64 = vlaneseq
    %v65 = vshrl.u32 %v64, 7
    %v66 = vsub.s32 1, %v65
    %v67 = vrot.slane %v58, %v66
    %vm70 = vcmask 64512
    %v72 = vsel %vm70, %v55, 0
    %74 = vmatprep.subr.mxu0 %v57
    %75 = vmatpush1.msra.mxu0 %v56
    %76 = vmatprep.subr.mxu0 0.0
    %77 = vmatpush1.msra.mxu0 0.0
    %78 = vmatprep.subr.mxu0 0.0
    %79 = vmatpush1.msra.mxu0 0.0
    %80 = vmatprep.subr.mxu0 0.0
    %81 = vmatpush1.msra.mxu0 0.0
    %82 = vmatprep.subr.mxu0 0.0
    %83 = vmatpush1.msra.mxu0 0.0
    %84 = vmatprep.subr.mxu0 0.0
    %85 = vmatpush1.msra.mxu0 0.0
    %86 = vmatprep.subr.mxu0 0.0
    %87 = vmatpush1.msra.mxu0 0.0
    %88 = vmatprep.subr.mxu0 0.0
    %89 = vmatpush1.msra.mxu0 0.0
    %90 = vmatprep.subr.mxu0 0.0
    %91 = vmatpush1.msra.mxu0 0.0
    %92 = vmatprep.subr.mxu0 0.0
    %93 = vmatpush1.msra.mxu0 0.0
    %94 = vmatprep.subr.mxu0 0.0
    %95 = vmatpush1.msra.mxu0 0.0
    %96 = vmatprep.subr.mxu0 0.0
    %97 = vmatpush1.msra.mxu0 0.0
    %98 = vmatprep.subr.mxu0 0.0
    %99 = vmatpush1.msra.mxu0 0.0
    %100 = vmatprep.subr.mxu0 0.0
    %101 = vmatpush1.msra.mxu0 0.0
    %102 = vmatprep.subr.mxu0 0.0
    %103 = vmatpush1.msra.mxu0 0.0
    %104 = vmatprep.subr.mxu0 0.0
    %105 = vmatpush1.msra.mxu0 0.0
    %106 = vmatprep.subr.mxu0 0.0
    %107 = vmatpush1.msra.mxu0 0.0
    %108 = vmatprep.subr.mxu0 0.0
    %109 = vmatpush1.msra.mxu0 0.0
    %110 = vmatprep.subr.mxu0 0.0
    %111 = vmatpush1.msra.mxu0 0.0
    %112 = vmatprep.subr.mxu0 0.0
    %113 = vmatpush1.msra.mxu0 0.0
    %114 = vmatprep.subr.mxu0 0.0
    %115 = vmatpush1.msra.mxu0 0.0
    %116 = vmatprep.subr.mxu0 0.0
    %117 = vmatpush1.msra.mxu0 0.0
    %118 = vmatprep.subr.mxu0 0.0
    %119 = vmatpush1.msra.mxu0 0.0
    %120 = vmatprep.subr.mxu0 0.0
    %121 = vmatpush1.msra.mxu0 0.0
    %122 = vmatprep.subr.mxu0 0.0
    %123 = vmatpush1.msra.mxu0 0.0
    %124 = vmatprep.subr.mxu0 0.0
    %125 = vmatpush1.msra.mxu0 0.0
    %126 = vmatprep.subr.mxu0 0.0
    %127 = vmatpush1.msra.mxu0 0.0
    %128 = vmatprep.subr.mxu0 0.0
    %129 = vmatpush1.msra.mxu0 0.0
    %130 = vmatprep.subr.mxu0 0.0
    %131 = vmatpush1.msra.mxu0 0.0
    %132 = vmatprep.subr.mxu0 0.0
    %133 = vmatpush1.msra.mxu0 0.0
    %134 = vmatprep.subr.mxu0 0.0
    %135 = vmatpush1.msra.mxu0 0.0
    %136 = vmatprep.subr.mxu0 0.0
    %137 = vmatpush1.msra.mxu0 0.0
    %138 = vmatprep.mubr.f32.mxu0 0.0
    %139 = vmatmul.mubr.f32.gmra.mrb[0].mxu0 %v72
    %v140 = vpop.f32.mrb[0].mxu0
    %v141 = vadd.f32 %v63, %v140
    %v142 = vpop.f32.mrb[0].mxu0
    %v143 = vadd.f32 %v67, %v142
    %144 = vdwg.mxu0
    %v145 = vmul.f32 %v141, %v143
    %v146 = vld [vmem:[#allocation7] sm:$0xff]
    %v147 = vld [vmem:[#allocation7 + $0x8] sm:$0xff]
    %v148 = vld [vmem:[#allocation7 + $0x10] sm:$0xff]
    %v149 = vld [vmem:[#allocation7 + $0x18] sm:$0xff]
    %v150 = vld [vmem:[#allocation7 + $0x20] sm:$0xff]
    %v151 = vld [vmem:[#allocation7 + $0x28] sm:$0xff]
    %v152 = vld [vmem:[#allocation7 + $0x30] sm:$0xff]
    %v153 = vld [vmem:[#allocation7 + $0x38] sm:$0xff]
    %v154 = vld [vmem:[#allocation7 + $0x40] sm:$0xff]
    %v155 = vld [vmem:[#allocation7 + $0x48] sm:$0xff]
    %v156 = vld [vmem:[#allocation7 + $0x50] sm:$0xff]
    %v157 = vld [vmem:[#allocation7 + $0x58] sm:$0xff]
    %v158 = vld [vmem:[#allocation7 + $0x60] sm:$0xff]
    %v159 = vld [vmem:[#allocation7 + $0x68] sm:$0xff]
    %v160 = vld [vmem:[#allocation7 + $0x70] sm:$0xff]
    %v161 = vld [vmem:[#allocation7 + $0x78] sm:$0xff]
    %162 = vmatprep.subr.mxu0 0.0
    %163 = vmatpush1.msra.mxu0 %v146
    %164 = vmatprep.subr.mxu0 0.0
    %165 = vmatpush1.msra.mxu0 %v147
    %166 = vmatprep.subr.mxu0 0.0
    %167 = vmatpush1.msra.mxu0 %v148
    %168 = vmatprep.subr.mxu0 0.0
    %169 = vmatpush1.msra.mxu0 %v149
    %170 = vmatprep.subr.mxu0 0.0
    %171 = vmatpush1.msra.mxu0 %v150
    %172 = vmatprep.subr.mxu0 0.0
    %173 = vmatpush1.msra.mxu0 %v151
    %174 = vmatprep.subr.mxu0 0.0
    %175 = vmatpush1.msra.mxu0 %v152
    %176 = vmatprep.subr.mxu0 0.0
    %177 = vmatpush1.msra.mxu0 %v153
    %178 = vmatprep.subr.mxu0 0.0
    %179 = vmatpush1.msra.mxu0 %v154
    %180 = vmatprep.subr.mxu0 0.0
    %181 = vmatpush1.msra.mxu0 %v155
    %182 = vmatprep.subr.mxu0 0.0
    %183 = vmatpush1.msra.mxu0 %v156
    %184 = vmatprep.subr.mxu0 0.0
    %185 = vmatpush1.msra.mxu0 %v157
    %186 = vmatprep.subr.mxu0 0.0
    %187 = vmatpush1.msra.mxu0 %v158
    %188 = vmatprep.subr.mxu0 0.0
    %189 = vmatpush1.msra.mxu0 %v159
    %190 = vmatprep.subr.mxu0 0.0
    %191 = vmatpush1.msra.mxu0 %v160
    %192 = vmatprep.subr.mxu0 0.0
    %193 = vmatpush1.msra.mxu0 %v161
    %194 = vmatprep.subr.mxu0 0.0
    %195 = vmatpush1.msra.mxu0 0.0
    %196 = vmatprep.subr.mxu0 0.0
    %197 = vmatpush1.msra.mxu0 0.0
    %198 = vmatprep.subr.mxu0 0.0
    %199 = vmatpush1.msra.mxu0 0.0
    %200 = vmatprep.subr.mxu0 0.0
    %201 = vmatpush1.msra.mxu0 0.0
    %202 = vmatprep.subr.mxu0 0.0
    %203 = vmatpush1.msra.mxu0 0.0
    %204 = vmatprep.subr.mxu0 0.0
    %205 = vmatpush1.msra.mxu0 0.0
    %206 = vmatprep.subr.mxu0 0.0
    %207 = vmatpush1.msra.mxu0 0.0
    %208 = vmatprep.subr.mxu0 0.0
    %209 = vmatpush1.msra.mxu0 0.0
    %210 = vmatprep.subr.mxu0 0.0
    %211 = vmatpush1.msra.mxu0 0.0
    %212 = vmatprep.subr.mxu0 0.0
    %213 = vmatpush1.msra.mxu0 0.0
    %214 = vmatprep.subr.mxu0 0.0
    %215 = vmatpush1.msra.mxu0 0.0
    %216 = vmatprep.subr.mxu0 0.0
    %217 = vmatpush1.msra.mxu0 0.0
    %218 = vmatprep.subr.mxu0 0.0
    %219 = vmatpush1.msra.mxu0 0.0
    %220 = vmatprep.subr.mxu0 0.0
    %221 = vmatpush1.msra.mxu0 0.0
    %222 = vmatprep.subr.mxu0 0.0
    %223 = vmatpush1.msra.mxu0 0.0
    %224 = vmatprep.subr.mxu0 0.0
    %225 = vmatpush1.msra.mxu0 0.0
    %226 = vmatprep.mubr.f32.mxu0 0.0
    %227 = vmatmul.mubr.f32.gmra.mrb[0].mxu0 %v145
    %v228 = vpop.f32.mrb[0].mxu0
    %v229 = vadd.f32 0.0, %v228
    %v230 = vpop.f32.mrb[0].mxu0
    %231 = vdwg.mxu0
    %232 = vst [vmem:[#allocation8] sm:$0xff] %v229
    // Predicated region
    $region30: #{tpu_custom_call.1} parent=1 // pred_check
      _
    $region31: #{tpu_custom_call.1} parent=1 // pred_check_branch
      %234 = sbr.rel (0) target = $region33
    $region32: #{tpu_custom_call.1} parent=1 // pred_region
      %s236 = ssub.s32 128, 128
      %237 = vsyncadd [#allocation4], %s236
      %s239 = sshll.u32 [#allocation8], 4
      %s240 = int_to_ptr.vmem [resolvable:$true] %s239
      %242 = dma.vmem_to_hbm [thread:$0]  %s240, 128, %s4, [#allocation4]
    $region33: #{tpu_custom_call.1} parent=1 // pred_fallthru
      _
    // Predicated region
    $region34: #{tpu_custom_call.1} parent=1 // pred_check
      _
    $region35: #{tpu_custom_call.1} parent=1 // pred_check_branch
      %244 = sbr.rel (0) target = $region37
    $region36: #{tpu_custom_call.1} parent=1 // pred_region
      %245 = dma.done [#allocation4], 128
    $region37: #{tpu_custom_call.1} parent=1 // pred_fallthru
      _
    %246 = vsyncpa [#allocation3], 1
    %247 = vsyncpa [#allocation6], 1
    %248 = vsyncpa [#allocation4], 1

</llo_original>
